<compile_context>
chip_gen: v7x
topology: tpu7x:2x2x1
jax: 0.10.0
libtpu: 0.0.40
codegen_flags: <defaults>
</compile_context>

<pallas_src>
import jax
import jax.numpy as jnp
from jax.experimental import pallas as pl
from jax.experimental.pallas import tpu as pltpu

EPS = 1e-5
NEG_SLOPE = 0.02


def _gram_stats_kernel(x_ref, g_ref, cs_ref):
    """Accumulate G = X·Xᵀ (C_in, C_in) and colsum = X·1 (C_in, 1) per image.

    x_ref is a native-layout NCHW slice (C_in, ts): the conv output is never
    materialized and no transposed copy of X is needed for the stats pass.
    """
    @pl.when(pl.program_id(1) == 0)
    def _():
        g_ref[...] = jnp.zeros_like(g_ref)
        cs_ref[...] = jnp.zeros_like(cs_ref)

    xt = x_ref[...]
    # (C_in, ts) x (C_in, ts) contracting the spatial axis of both -> (C_in, C_in)
    # (trans-b style dot_general: the well-supported q@k.T MXU pattern).
    g_ref[...] += jax.lax.dot_general(
        xt, xt, (((1,), (1,)), ((), ())), preferred_element_type=jnp.float32)
    cs_ref[...] += jnp.sum(xt, axis=1, keepdims=True)


def _convt_bn_lrelu_kernel(x_ref, wk_ref, scale_ref, shift_ref, o_ref):
    """Fused ConvTranspose(k=2,s=2) + BN affine + LeakyReLU for one row tile.

    x_ref:        (R*W, C_in)        pixel-major tile covering R full image rows
    wk_ref:       (2, C_in, 2*C_out) ki-split packed weights, lanes = (kj, co)
    scale/shift:  (1, 2*C_out)       fused BN affine, tiled per kj
    o_ref:        (R, 2, W, 2*C_out) rows x ki x j x (kj, co) -> NHWC by reshape
    """
    x = x_ref[...]
    R = o_ref.shape[0]
    W = o_ref.shape[2]
    KC = o_ref.shape[3]
    for ki in range(2):                      # static unroll: 2 MXU matmuls / tile
        y = jnp.dot(x, wk_ref[ki], preferred_element_type=jnp.float32)
        z = y * scale_ref[...] + shift_ref[...]
        z = jnp.where(z >= 0, z, NEG_SLOPE * z)
        # (R*W, 2*C_out) -> (R, W, 2*C_out): sublane-split only (free when W%8==0).
        o_ref[:, ki, :, :] = z.reshape(R, W, KC).astype(o_ref.dtype)


def _round_up(v, m):
    return ((v + m - 1) // m) * m


def _pick_row_tile(N, H, W, C_in, C_out, budget_bytes=3 << 20):
    """Rows of the input image per pass-2 grid step (R must divide H)."""
    # Budget against *lane-padded* VMEM footprints (last dim pads to 128 lanes)
    # so double-buffered x + out tiles stay far below the scoped-VMEM default
    # on every generation (v5e 16 MiB ... v7x 32 MiB).
    px_bytes = 4 * (_round_up(C_in, 128) + 2 * _round_up(2 * C_out, 128))
    max_px = max(W, budget_bytes // px_bytes)
    divs = [r for r in range(1, H + 1) if H % r == 0]
    cands = [r for r in divs if (r * W) % 8 == 0 and r * W <= max_px]
    if not cands:
        # TODO(synk): pad P for exotic widths where no row multiple is 8-aligned.
        return H
    r = max(cands)
    if N * (H // r) < 2:                     # v7x: give both TensorCores work
        halves = [c for c in cands if H // c >= 2]
        if halves:
            r = max(halves)
    return r


def _pick_gram_tile(HW, C_in, budget_bytes=4 << 20):
    """Spatial tile for the stats pass: divides H*W and is lane-aligned (x128)."""
    max_px = max(128, budget_bytes // (4 * max(C_in, 1)))
    if HW <= max_px:
        return HW
    cands = [k * 128 for k in range(1, HW // 128 + 1)
             if HW % (k * 128) == 0 and k * 128 <= max_px]
    return max(cands) if cands else HW


def upsample_block(x, weight, bias, gamma, beta):
    """ConvTranspose2d(k=2,s=2) -> BatchNorm2d(train) -> LeakyReLU(0.02), NCHW."""
    del bias  # exact no-op: train-mode BN subtracts the batch mean of the conv output
    N, C_in, H, W = x.shape
    C_out = weight.shape[1]
    P = N * H * W
    HW = H * W

    # ---- Pass 1: Gram-matrix batch statistics (reads x in native NCHW layout) --
    ts_g = _pick_gram_tile(HW, C_in)
    sg = HW // ts_g
    x_nc = x.reshape(N, C_in, HW)            # pure reshape, no HBM traffic
    gram, colsum = pl.pallas_call(
        _gram_stats_kernel,
        out_shape=(jax.ShapeDtypeStruct((N, C_in, C_in), jnp.float32),
                   jax.ShapeDtypeStruct((N, C_in, 1), jnp.float32)),
        grid_spec=pltpu.PrefetchScalarGridSpec(
            num_scalar_prefetch=0,
            grid=(N, sg),
            in_specs=[pl.BlockSpec((None, C_in, ts_g), lambda n, s: (n, 0, s))],
            out_specs=[pl.BlockSpec((None, C_in, C_in), lambda n, s: (n, 0, 0)),
                       pl.BlockSpec((None, C_in, 1), lambda n, s: (n, 0, 0))],
        ),
        compiler_params=pltpu.CompilerParams(
            dimension_semantics=("parallel", "arbitrary")),
    )(x_nc)

    G = jnp.sum(gram, axis=0)                            # (C_in, C_in)
    cs = jnp.sum(colsum, axis=0)[:, 0]                   # (C_in,)

    # Packed weights: wt[ci, ki, kj, co] = weight[ci, co, ki, kj]
    wt = jnp.transpose(weight, (0, 2, 3, 1))             # (C_in, 2, 2, C_out)
    wp = wt.reshape(C_in, 4 * C_out)                     # columns (ki, kj, co)
    wk = jnp.transpose(wt, (1, 0, 2, 3)).reshape(2, C_in, 2 * C_out)

    # Conv-output batch statistics from X-side sufficient statistics:
    #   ysum[col] = cs · wp[:, col]        yssq[col] = wp[:, col]ᵀ G wp[:, col]
    ysum = (cs @ wp).reshape(4, C_out).sum(axis=0)                        # (C_out,)
    yssq = jnp.sum(wp * (G @ wp), axis=0).reshape(4, C_out).sum(axis=0)   # (C_out,)
    total = jnp.float32(4 * P)                           # N * 2H * 2W per channel
    mean = ysum / total
    var = jnp.maximum(yssq / total - mean * mean, 0.0)   # E[y^2]-E[y]^2, clamped
    scale = gamma * jax.lax.rsqrt(var + EPS)
    shift = beta - mean * scale
    scale_p = jnp.tile(scale, 2).reshape(1, 2 * C_out)   # per (kj, co) lane
    shift_p = jnp.tile(shift, 2).reshape(1, 2 * C_out)

    # ---- Pass 2: fused conv + BN affine + LeakyReLU, NHWC-ordered output -------
    R = _pick_row_tile(N, H, W, C_in, C_out)
    S = H // R
    # Pixel-major activations (one XLA transpose over X, 4*C_out/C_in smaller
    # than the output stream).  TODO(synk): read NCHW blocks directly instead.
    x_flat = jnp.transpose(x, (0, 2, 3, 1)).reshape(P, C_in)

    out4 = pl.pallas_call(
        _convt_bn_lrelu_kernel,
        out_shape=jax.ShapeDtypeStruct((N * H, 2, W, 2 * C_out), jnp.float32),
        grid_spec=pltpu.PrefetchScalarGridSpec(
            num_scalar_prefetch=0,
            grid=(N, S),
            in_specs=[
                pl.BlockSpec((R * W, C_in), lambda n, s: (n * S + s, 0)),
                pl.BlockSpec((2, C_in, 2 * C_out), lambda n, s: (0, 0, 0)),
                pl.BlockSpec((1, 2 * C_out), lambda n, s: (0, 0)),
                pl.BlockSpec((1, 2 * C_out), lambda n, s: (0, 0)),
            ],
            out_specs=pl.BlockSpec((R, 2, W, 2 * C_out),
                                   lambda n, s: (n * S + s, 0, 0, 0)),
        ),
        compiler_params=pltpu.CompilerParams(
            dimension_semantics=("parallel", "parallel")),
    )(x_flat, wk, scale_p, shift_p)

    # out4[(n*H+i), ki, j, kj*C_out+co] is already NHWC memory order:
    nhwc = out4.reshape(N, 2 * H, 2 * W, C_out)          # pure reshape, no copy
    # TODO(synk): emit NHWC to the consumer to drop this last full-tensor
    # transpose; the module contract (PyTorch) is NCHW, so convert here.
    return jnp.transpose(nhwc, (0, 3, 1, 2))


def reference(x, weight, bias, gamma, beta):
    """Pure-JAX reference (ConvTranspose2d k=2 s=2 -> BN train -> LeakyReLU)."""
    N, C_in, H, W = x.shape
    C_out = weight.shape[1]
    y = jnp.einsum('ncij,cokl->noikjl', x, weight).reshape(N, C_out, 2 * H, 2 * W)
    y = y + bias[None, :, None, None]
    mean = y.mean(axis=(0, 2, 3), keepdims=True)
    var = y.var(axis=(0, 2, 3), keepdims=True)   # biased, as PyTorch BN normalizes
    yn = (y - mean) / jnp.sqrt(var + EPS)
    yn = yn * gamma[None, :, None, None] + beta[None, :, None, None]
    return jnp.where(yn >= 0, yn, NEG_SLOPE * yn)


if __name__ == "__main__":
    key = jax.random.PRNGKey(0)
    kx, kw, kb, kg, kbe = jax.random.split(key, 5)

    N, C_in, C_out, H, W = 2, 4, 8, 16, 16
    x = jax.random.normal(kx, (N, C_in, H, W), jnp.float32)
    # ConvTranspose2d weight shape: (in_channels, out_channels, kH, kW)
    weight = 0.1 * jax.random.normal(kw, (C_in, C_out, 2, 2), jnp.float32)
    bias = 0.1 * jax.random.normal(kb, (C_out,), jnp.float32)
    # BatchNorm2d affine params (perturbed from default init to exercise the affine)
    gamma = 1.0 + 0.1 * jax.random.normal(kg, (C_out,), jnp.float32)
    beta = 0.1 * jax.random.normal(kbe, (C_out,), jnp.float32)

    out = upsample_block(x, weight, bias, gamma, beta)
    out = jax.block_until_ready(out)

    ref = reference(x, weight, bias, gamma, beta)
    assert out.shape == (N, C_out, 2 * H, 2 * W)
    err = float(jnp.max(jnp.abs(out - ref)))
    assert jnp.allclose(out, ref, atol=1e-4, rtol=1e-4), err
    print("KERNEL_OK")
</pallas_src>

<mosaic_0001>
module attributes {stable_mosaic.version = 11 : i64} {
  func.func @_gram_stats_kernel(%arg0: i32, %arg1: i32, %arg2: memref<1x4x256xf32, #tpu.memory_space<vmem>>, %arg3: memref<1x4x4xf32, #tpu.memory_space<vmem>>, %arg4: memref<1x4x1xf32, #tpu.memory_space<vmem>>) attributes {dimension_semantics = [#tpu.dimension_semantics<parallel>, #tpu.dimension_semantics<arbitrary>], iteration_bounds = array<i64: 2, 1>, scalar_prefetch = 0 : i64, scratch_operands = 0 : i64, tpu.core_type = #tpu.core_type<tc>, window_params = [{transform_indices = @transform_0, window_bounds = array<i64: 1, 4, 256>}, {transform_indices = @transform_1, window_bounds = array<i64: 1, 4, 4>}, {transform_indices = @transform_2, window_bounds = array<i64: 1, 4, 1>}]} {
    %c0_i32 = arith.constant 0 : i32
    %0 = arith.cmpi eq, %arg1, %c0_i32 : i32
    %1 = arith.extui %0 : i1 to i32
    %c0_i32_0 = arith.constant 0 : i32
    %2 = arith.cmpi ne, %1, %c0_i32_0 : i32
    scf.if %2 {
      %cst_16 = arith.constant 0.000000e+00 : f32
      %20 = vector.broadcast %cst_16 : f32 to vector<4x4xf32>
      %c0_17 = arith.constant 0 : index
      %c0_18 = arith.constant 0 : index
      %c0_19 = arith.constant 0 : index
      %21 = vector.load %arg3[%c0_17, %c0_18, %c0_19] : memref<1x4x4xf32, #tpu.memory_space<vmem>>, vector<1x4x4xf32>
      %22 = vector.shape_cast %21 : vector<1x4x4xf32> to vector<4x4xf32>
      %23 = vector.shape_cast %20 : vector<4x4xf32> to vector<1x4x4xf32>
      tpu.vector_store %arg3[%c0_17, %c0_18, %c0_19], %23 {strides = array<i32>} : memref<1x4x4xf32, #tpu.memory_space<vmem>>, vector<1x4x4xf32>,
      %cst_20 = arith.constant 0.000000e+00 : f32
      %24 = vector.broadcast %cst_20 : f32 to vector<4x1xf32>
      %c0_21 = arith.constant 0 : index
      %c0_22 = arith.constant 0 : index
      %c0_23 = arith.constant 0 : index
      %25 = vector.load %arg4[%c0_21, %c0_22, %c0_23] : memref<1x4x1xf32, #tpu.memory_space<vmem>>, vector<1x4x1xf32>
      %26 = vector.shape_cast %25 : vector<1x4x1xf32> to vector<4x1xf32>
      %27 = vector.shape_cast %24 : vector<4x1xf32> to vector<1x4x1xf32>
      tpu.vector_store %arg4[%c0_21, %c0_22, %c0_23], %27 {strides = array<i32>} : memref<1x4x1xf32, #tpu.memory_space<vmem>>, vector<1x4x1xf32>,
    } else {
    }
    %c0 = arith.constant 0 : index
    %c0_1 = arith.constant 0 : index
    %c0_2 = arith.constant 0 : index
    %3 = vector.load %arg2[%c0, %c0_1, %c0_2] : memref<1x4x256xf32, #tpu.memory_space<vmem>>, vector<1x4x256xf32>
    %4 = vector.shape_cast %3 : vector<1x4x256xf32> to vector<4x256xf32>
    %c0_3 = arith.constant 0 : index
    %c0_4 = arith.constant 0 : index
    %c0_5 = arith.constant 0 : index
    %5 = vector.load %arg3[%c0_3, %c0_4, %c0_5] : memref<1x4x4xf32, #tpu.memory_space<vmem>>, vector<1x4x4xf32>
    %6 = vector.shape_cast %5 : vector<1x4x4xf32> to vector<4x4xf32>
    %cst = arith.constant dense<0.000000e+00> : vector<4x4xf32>
    %7 = tpu.matmul %4, %4, %cst {dimension_numbers = #tpu.dot_dimension_numbers<[1], [1], [0], [0], [0, 0, 1, 0], [], []>} : vector<4x256xf32>, vector<4x256xf32>, vector<4x4xf32> -> vector<4x4xf32>
    %8 = arith.addf %6, %7 : vector<4x4xf32>
    %c0_6 = arith.constant 0 : index
    %c0_7 = arith.constant 0 : index
    %c0_8 = arith.constant 0 : index
    %9 = vector.load %arg3[%c0_6, %c0_7, %c0_8] : memref<1x4x4xf32, #tpu.memory_space<vmem>>, vector<1x4x4xf32>
    %10 = vector.shape_cast %9 : vector<1x4x4xf32> to vector<4x4xf32>
    %11 = vector.shape_cast %8 : vector<4x4xf32> to vector<1x4x4xf32>
    tpu.vector_store %arg3[%c0_6, %c0_7, %c0_8], %11 {strides = array<i32>} : memref<1x4x4xf32, #tpu.memory_space<vmem>>, vector<1x4x4xf32>,
    %c0_9 = arith.constant 0 : index
    %c0_10 = arith.constant 0 : index
    %c0_11 = arith.constant 0 : index
    %12 = vector.load %arg4[%c0_9, %c0_10, %c0_11] : memref<1x4x1xf32, #tpu.memory_space<vmem>>, vector<1x4x1xf32>
    %13 = vector.shape_cast %12 : vector<1x4x1xf32> to vector<4x1xf32>
    %cst_12 = arith.constant dense<0.000000e+00> : vector<4xf32>
    %14 = vector.multi_reduction <add>, %4, %cst_12 [1] : vector<4x256xf32> to vector<4xf32>
    %15 = vector.shape_cast %14 : vector<4xf32> to vector<4x1xf32>
    %16 = arith.addf %13, %15 : vector<4x1xf32>
    %c0_13 = arith.constant 0 : index
    %c0_14 = arith.constant 0 : index
    %c0_15 = arith.constant 0 : index
    %17 = vector.load %arg4[%c0_13, %c0_14, %c0_15] : memref<1x4x1xf32, #tpu.memory_space<vmem>>, vector<1x4x1xf32>
    %18 = vector.shape_cast %17 : vector<1x4x1xf32> to vector<4x1xf32>
    %19 = vector.shape_cast %16 : vector<4x1xf32> to vector<1x4x1xf32>
    tpu.vector_store %arg4[%c0_13, %c0_14, %c0_15], %19 {strides = array<i32>} : memref<1x4x1xf32, #tpu.memory_space<vmem>>, vector<1x4x1xf32>,
    return
  }
  func.func @transform_0(%arg0: i32, %arg1: i32) -> (i32, i32, i32) {
    %c0_i32 = arith.constant 0 : i32
    %c0_i32_0 = arith.constant 0 : i32
    return %arg0, %c0_i32, %arg1 : i32, i32, i32
  }
  func.func @transform_1(%arg0: i32, %arg1: i32) -> (i32, i32, i32) {
    %c0_i32 = arith.constant 0 : i32
    %c0_i32_0 = arith.constant 0 : i32
    %c0_i32_1 = arith.constant 0 : i32
    return %arg0, %c0_i32, %c0_i32_0 : i32, i32, i32
  }
  func.func @transform_2(%arg0: i32, %arg1: i32) -> (i32, i32, i32) {
    %c0_i32 = arith.constant 0 : i32
    %c0_i32_0 = arith.constant 0 : i32
    %c0_i32_1 = arith.constant 0 : i32
    return %arg0, %c0_i32, %c0_i32_0 : i32, i32, i32
  }
}

</mosaic_0001>

<llo_original>
// kernel: tpu_custom_call.1
$region0: #{tpu_custom_call.1}
  #allocation0 [shape = 'u32[]', space=smem, size = 0x4, offset = 0x4, fixed_abs, tag = 'smem constant byte address 0x4 - core index']
  #allocation1 [shape = 'u32[144,128]{1,0:T(1,128)}', space=vmem, size = 0x12000, scoped, tag = 'internal scratch']
  %s0 = inlined_call_operand.hbm [shape: f32[2,4,256], index: 0, kind: input, shape index: {}]
  %s1 = inlined_call_operand.hbm [shape: f32[2,4,4], index: 1, kind: output, shape index: {0}]
  %s2 = inlined_call_operand.vmem [shape: f32[2,4,1], index: 2, kind: output, shape index: {1}]
  %3 = xla_tuple %s1, %s2
  %s4 = sld [smem:[#allocation0]]
  $region53: #{tpu_custom_call.1} parent=0
    _
  %s6 = ssub.s32 1, %s4
  %s7 = scalar_select 0, %s6, %s4
  $region1: #{tpu_custom_call.1} parent=0
    #allocation2 [shape = 'u8[8192]{0}', space=vmem, size = 0x2000, scoped, tag = 'input window, operand 0']
    #allocation3 [shape = 's32[2]{0}', space=sflag, size = 0x8, scoped, tag = 'scoped memory for tpu_custom_call.1']
    #allocation4 [shape = 's32[2]{0}', space=sflag, size = 0x8, scoped, tag = 'scoped memory for tpu_custom_call.1']
    #allocation5 [shape = 'u8[4096]{0}', space=vmem, size = 0x1000, scoped, tag = 'output window, operand 0']
    %8 = vsyncpa [#allocation3], 0
    %s9 = scalar_lea.sflag [#allocation3], 1
    %10 = vsyncpa %s9, 0
    %11 = vsyncpa [#allocation4], 0
    %s12 = scalar_lea.sflag [#allocation4], 1
    %13 = vsyncpa %s12, 0
    loop: start=0, step=1, limit=4
    $region2: #{tpu_custom_call.1} parent=1 // loop_pre_header
      _
    $region3: #{tpu_custom_call.1} parent=1 // loop_header
      %s15 = sphi 0, %s19
      %p16 = scmp.ge.s32.totalorder %s15, 4
      %s22 = sphi 0, %s34
      %s23 = sphi 0, %s30
      %s24 = sphi 0, %s22
      %s25 = sphi 0, %s23
      %s26 = sphi 0, %s24
      %s27 = sphi 0, %s25
      %s39 = sphi 0, %s41
      %s42 = sphi 0, %s39
      %s43 = sphi 0, %s42
      %s59 = sphi 0, %s43
      %s65 = sphi 0, %s67
      %s68 = sphi 0, %s65
      %s69 = sphi 0, %s68
      %s85 = sphi 0, %s69
      %s91 = sphi 0, %s93
      %s94 = sphi 0, %s91
      %s95 = sphi 0, %s94
      %s111 = sphi 0, %s95
    $region4: #{tpu_custom_call.1} parent=1 // loop_header_branch
      %18 = sbr.rel (%p16) target = $region8
    $region5: #{tpu_custom_call.1} parent=1 // loop_body
      %s20 = ssub.s32 %s15, 1
      %s21 = ssub.s32 %s15, 2
      %s28 = sadd.s32 1, %s23
      %p29 = scmp.ge.s32.totalorder %s28, 1
      %s30 = scalar_select %p29, 0, %s28
      %s31 = sadd.s32 1, %s22
      %s32 = scalar_select %p29, %s31, %s22
      %p33 = scmp.ge.s32.totalorder %s32, 2
      %s34 = scalar_select %p33, 0, %s32
      %s35 = ssub.s32 %s22, %s34
      %s36 = ssub.s32 %s23, %s30
      %s37 = sor.u32 %s35, %s36
      %p38 = scmp.eq.s32.totalorder %s37, 0
      %s40 = sadd.s32 %s39, 1
      %s41 = scalar_select %p38, %s39, %s40
      %p44 = pneg %p38
      %p45 = scmp.eq.s32.totalorder %s15, 1
      %p46 = por %p44, %p45
      %p47 = scmp.ne.s32.totalorder %s39, %s42
      %p48 = scmp.eq.s32.totalorder %s15, 0
      %p49 = por %p47, %p48
      %p50 = scmp.ne.s32.totalorder %s39, %s42
      %p51 = scmp.eq.s32.totalorder %s20, 1
      %p52 = por %p50, %p51
      %p53 = scmp.ne.s32.totalorder %s42, %s43
      %p54 = scmp.eq.s32.totalorder %s20, 0
      %p55 = por %p53, %p54
      %p56 = scmp.ne.s32.totalorder %s42, %s43
      %p57 = scmp.eq.s32.totalorder %s21, 1
      %p58 = por %p56, %p57
      %p60 = scmp.ne.s32.totalorder %s43, %s59
      %p61 = scmp.eq.s32.totalorder %s21, 0
      %p62 = por %p60, %p61
      %s63 = ssub.s32 %s22, %s34
      %p64 = scmp.eq.s32.totalorder %s63, 0
      %s66 = sadd.s32 %s65, 1
      %s67 = scalar_select %p64, %s65, %s66
      %p70 = pneg %p64
      %p71 = scmp.eq.s32.totalorder %s15, 1
      %p72 = por %p70, %p71
      %p73 = scmp.ne.s32.totalorder %s65, %s68
      %p74 = scmp.eq.s32.totalorder %s15, 0
      %p75 = por %p73, %p74
      %p76 = scmp.ne.s32.totalorder %s65, %s68
      %p77 = scmp.eq.s32.totalorder %s20, 1
      %p78 = por %p76, %p77
      %p79 = scmp.ne.s32.totalorder %s68, %s69
      %p80 = scmp.eq.s32.totalorder %s20, 0
      %p81 = por %p79, %p80
      %p82 = scmp.ne.s32.totalorder %s68, %s69
      %p83 = scmp.eq.s32.totalorder %s21, 1
      %p84 = por %p82, %p83
      %p86 = scmp.ne.s32.totalorder %s69, %s85
      %p87 = scmp.eq.s32.totalorder %s21, 0
      %p88 = por %p86, %p87
      %s89 = ssub.s32 %s22, %s34
      %p90 = scmp.eq.s32.totalorder %s89, 0
      %s92 = sadd.s32 %s91, 1
      %s93 = scalar_select %p90, %s91, %s92
      %p96 = pneg %p90
      %p97 = scmp.eq.s32.totalorder %s15, 1
      %p98 = por %p96, %p97
      %p99 = scmp.ne.s32.totalorder %s91, %s94
      %p100 = scmp.eq.s32.totalorder %s15, 0
      %p101 = por %p99, %p100
      %p102 = scmp.ne.s32.totalorder %s91, %s94
      %p103 = scmp.eq.s32.totalorder %s20, 1
      %p104 = por %p102, %p103
      %p105 = scmp.ne.s32.totalorder %s94, %s95
      %p106 = scmp.eq.s32.totalorder %s20, 0
      %p107 = por %p105, %p106
      %p108 = scmp.ne.s32.totalorder %s94, %s95
      %p109 = scmp.eq.s32.totalorder %s21, 1
      %p110 = por %p108, %p109
      %p112 = scmp.ne.s32.totalorder %s95, %s111
      %p113 = scmp.eq.s32.totalorder %s21, 0
      %p114 = por %p112, %p113
      %p115 = scmp.le.s32.totalorder 1, %s15
      %p116 = scmp.lt.s32.totalorder %s15, 3
      %p117 = pnand %p115, %p116
      %p118 = pneg %p117
      // Predicated region
      $region9: #{tpu_custom_call.1} parent=5 // pred_check
        _
      $region10: #{tpu_custom_call.1} parent=5 // pred_check_branch
        %120 = sbr.rel (%p117) target = $region12
      $region11: #{tpu_custom_call.1} parent=5 // pred_region
        %s121 = ssub.s32 %s15, 1
      $region12: #{tpu_custom_call.1} parent=5 // pred_fallthru
        _
      %p122 = scmp.lt.s32.totalorder %s15, 2
      // Predicated region
      $region13: #{tpu_custom_call.1} parent=5 // pred_check
        %p123 = pneg %p122
      $region14: #{tpu_custom_call.1} parent=5 // pred_check_branch
        %125 = sbr.rel (%p123) target = $region16
      $region15: #{tpu_custom_call.1} parent=5 // pred_region
        // Predicated region
        $region17: #{tpu_custom_call.1} parent=15 // pred_check
          %p126 = pneg %p49
        $region18: #{tpu_custom_call.1} parent=15 // pred_check_branch
          %128 = sbr.rel (%p126) target = $region20
        $region19: #{tpu_custom_call.1} parent=15 // pred_region
          %s129 = sand.u32 %s39, 1
          %s130 = scalar_lea.sflag [#allocation3], %s129
          %s131 = sand.u32 %s39, 1
          %s132 = smul.addr %s131, 8
          %s133 = scalar_lea.vmem [#allocation2], %s132
          %s134 = smul.u32 2, %s23
          %s136 = ssub.s32 128, 128
          %137 = vsyncadd %s130, %s136
          %s138 = smul.addr %s22, 2
          %s139 = sadd.s32 %s134, %s138
          %s140 = smul.addr %s139, 64
          %s141 = scalar_lea.hbm %s0, %s140
          %s143 = sshll.u32 %s133, 4
          %s144 = int_to_ptr.vmem [resolvable:$true] %s143
          %146 = dma.hbm_to_vmem [thread:$0]  %s141, 128, %s144, %s130
        $region20: #{tpu_custom_call.1} parent=15 // pred_fallthru
          _
      $region16: #{tpu_custom_call.1} parent=5 // pred_fallthru
        _
      %p147 = scmp.le.s32.totalorder 1, %s15
      %p148 = scmp.lt.s32.totalorder %s15, 3
      %p149 = pnand %p147, %p148
      %p150 = pneg %p149
      // Predicated region
      $region21: #{tpu_custom_call.1} parent=5 // pred_check
        _
      $region22: #{tpu_custom_call.1} parent=5 // pred_check_branch
        %152 = sbr.rel (%p149) target = $region24
      $region23: #{tpu_custom_call.1} parent=5 // pred_region
        %s153 = ssub.s32 %s15, 1
        %s154 = sand.u32 %s42, 1
        %s155 = scalar_lea.sflag [#allocation3], %s154
        %s156 = sand.u32 %s42, 1
        %s157 = smul.addr %s156, 8
        %s158 = scalar_lea.vmem [#allocation2], %s157
        // Predicated region
        $region25: #{tpu_custom_call.1} parent=23 // pred_check
          %p159 = pneg %p55
        $region26: #{tpu_custom_call.1} parent=23 // pred_check_branch
          %161 = sbr.rel (%p159) target = $region28
        $region27: #{tpu_custom_call.1} parent=23 // pred_region
          %162 = dma.done %s155, 128
        $region28: #{tpu_custom_call.1} parent=23 // pred_fallthru
          _
        %s163 = sand.u32 %s42, 1
        %s164 = scalar_lea.sflag [#allocation3], %s163
        %s165 = sand.u32 %s42, 1
        %s166 = smul.addr %s165, 8
        %s167 = scalar_lea.vmem [#allocation2], %s166
        %p168 = pneg %p55
        %p169 = pneg %p52
        %p170 = pneg %p81
        %p171 = pneg %p78
        %s172 = sand.u32 %s68, 1
        %s173 = scalar_lea.sflag [#allocation4], %s172
        %s174 = sand.u32 %s68, 1
        %s175 = smul.addr %s174, 4
        %s176 = scalar_lea.vmem [#allocation5], %s175
        %p177 = pneg %p107
        %p178 = pneg %p104
        %p179 = scmp.lt.s32.totalorder %s24, 1
        %s180 = scalar_select %p179, %s24, 1
        %s181 = smul.addr %s180, 4
        %s182 = scalar_lea.vmem %s2, %s181
        %s183 = smul.u32 2, %s25
        %p184 = scmp.lt.s32.totalorder %s24, 1
        %s185 = scalar_select %p184, %s24, 1
        %s186 = smul.addr %s185, 4
        %s187 = scalar_lea.vmem %s2, %s186
        %p188 = scmp.eq.s32.totalorder %s25, 0
        // Predicated region
        $region29: #{tpu_custom_call.1} parent=23 // pred_check
          %p189 = pneg %p188
        $region30: #{tpu_custom_call.1} parent=23 // pred_check_branch
          %191 = sbr.rel (%p189) target = $region32
        $region31: #{tpu_custom_call.1} parent=23 // pred_region
          %vm192 = vcmask 27648
          %193 = vst.msk [vmem:[%s176] sm:$0xf] %vm192, 0.0
          %vm194 = vcmask 3072
          %195 = vst.msk [vmem:[%s187] sm:$0xf] %vm194, 0.0
        $region32: #{tpu_custom_call.1} parent=23 // pred_fallthru
          _
        %v196 = vld [vmem:[%s158] sm:$0xff]
        %v197 = vld [vmem:[%s176] sm:$0xf]
        %v199 = vcombine.high %v196, %v196
        %201 = vmatprep.subr.mxu0 %v199
        %202 = vmatpush1.xpose.msra.mxu0 %v196
        %203 = vmatprep.subr.mxu0 0.0
        %204 = vmatpush1.xpose.msra.mxu0 0.0
        %205 = vmatprep.subr.mxu0 0.0
        %206 = vmatpush1.xpose.msra.mxu0 0.0
        %207 = vmatprep.subr.mxu0 0.0
        %208 = vmatpush1.xpose.msra.mxu0 0.0
        %209 = vmatprep.subr.mxu0 0.0
        %210 = vmatpush1.xpose.msra.mxu0 0.0
        %211 = vmatprep.subr.mxu0 0.0
        %212 = vmatpush1.xpose.msra.mxu0 0.0
        %213 = vmatprep.subr.mxu0 0.0
        %214 = vmatpush1.xpose.msra.mxu0 0.0
        %215 = vmatprep.subr.mxu0 0.0
        %216 = vmatpush1.xpose.msra.mxu0 0.0
        %217 = vmatprep.subr.mxu0 0.0
        %218 = vmatpush1.xpose.msra.mxu0 0.0
        %219 = vmatprep.subr.mxu0 0.0
        %220 = vmatpush1.xpose.msra.mxu0 0.0
        %221 = vmatprep.subr.mxu0 0.0
        %222 = vmatpush1.xpose.msra.mxu0 0.0
        %223 = vmatprep.subr.mxu0 0.0
        %224 = vmatpush1.xpose.msra.mxu0 0.0
        %225 = vmatprep.subr.mxu0 0.0
        %226 = vmatpush1.xpose.msra.mxu0 0.0
        %227 = vmatprep.subr.mxu0 0.0
        %228 = vmatpush1.xpose.msra.mxu0 0.0
        %229 = vmatprep.subr.mxu0 0.0
        %230 = vmatpush1.xpose.msra.mxu0 0.0
        %231 = vmatprep.subr.mxu0 0.0
        %232 = vmatpush1.xpose.msra.mxu0 0.0
        %233 = vmatprep.subr.mxu0 0.0
        %234 = vmatpush1.xpose.msra.mxu0 0.0
        %235 = vmatprep.subr.mxu0 0.0
        %236 = vmatpush1.xpose.msra.mxu0 0.0
        %237 = vmatprep.subr.mxu0 0.0
        %238 = vmatpush1.xpose.msra.mxu0 0.0
        %239 = vmatprep.subr.mxu0 0.0
        %240 = vmatpush1.xpose.msra.mxu0 0.0
        %241 = vmatprep.subr.mxu0 0.0
        %242 = vmatpush1.xpose.msra.mxu0 0.0
        %243 = vmatprep.subr.mxu0 0.0
        %244 = vmatpush1.xpose.msra.mxu0 0.0
        %245 = vmatprep.subr.mxu0 0.0
        %246 = vmatpush1.xpose.msra.mxu0 0.0
        %247 = vmatprep.subr.mxu0 0.0
        %248 = vmatpush1.xpose.msra.mxu0 0.0
        %249 = vmatprep.subr.mxu0 0.0
        %250 = vmatpush1.xpose.msra.mxu0 0.0
        %251 = vmatprep.subr.mxu0 0.0
        %252 = vmatpush1.xpose.msra.mxu0 0.0
        %253 = vmatprep.subr.mxu0 0.0
        %254 = vmatpush1.xpose.msra.mxu0 0.0
        %255 = vmatprep.subr.mxu0 0.0
        %256 = vmatpush1.xpose.msra.mxu0 0.0
        %257 = vmatprep.subr.mxu0 0.0
        %258 = vmatpush1.xpose.msra.mxu0 0.0
        %259 = vmatprep.subr.mxu0 0.0
        %260 = vmatpush1.xpose.msra.mxu0 0.0
        %261 = vmatprep.subr.mxu0 0.0
        %262 = vmatpush1.xpose.msra.mxu0 0.0
        %263 = vmatprep.subr.mxu0 0.0
        %264 = vmatpush1.xpose.msra.mxu0 0.0
        %265 = vmatprep.mubr.f32.mxu0 %v199
        %266 = vmatmul.mubr.f32.gmra.mrb[0].mxu0 %v196
        %v267 = vpop.f32.mrb[0].mxu0
        %v268 = vadd.f32 0.0, %v267
        %v269 = vpop.f32.mrb[0].mxu0
        %270 = vdwg.mxu0
        %v271 = vadd.f32 %v197, %v268
        %vm272 = vcmask 27648
        %273 = vst.msk [vmem:[%s176] sm:$0xf] %vm272, %v271
        %v274 = vld [vmem:[%s187] sm:$0xf]
        %vm275 = vcmask 1043456
        %v276 = vsel %vm275, %v196, 0.0
        %v277 = vsel %vm275, %v199, 0.0
        %v278 = vadd.f32 %v276, %v277
        %279 = vadd.xlane.f32.xlu0 %v278
        %v280 = vpop.xlane.xlu0 %279
        %v281 = vadd.f32 %v274, %v280
        %vm282 = vcmask 3072
        %283 = vst.msk [vmem:[%s187] sm:$0xf] %vm282, %v281
        %s284 = sand.u32 %s68, 1
        %s285 = scalar_lea.sflag [#allocation4], %s284
        %s286 = sand.u32 %s68, 1
        %s287 = smul.addr %s286, 4
        %s288 = scalar_lea.vmem [#allocation5], %s287
        %p289 = scmp.lt.s32.totalorder %s24, 1
        %s290 = scalar_select %p289, %s24, 1
        %s291 = smul.addr %s290, 4
        %s292 = scalar_lea.vmem %s2, %s291
        // Predicated region
        $region33: #{tpu_custom_call.1} parent=23 // pred_check
          %p293 = pneg %p78
        $region34: #{tpu_custom_call.1} parent=23 // pred_check_branch
          %295 = sbr.rel (%p293) target = $region36
        $region35: #{tpu_custom_call.1} parent=23 // pred_region
          %s297 = ssub.s32 64, 64
          %298 = vsyncadd %s285, %s297
          %s299 = smul.addr %s24, 64
          %s300 = scalar_lea.hbm %s1, %s299
          %s302 = sshll.u32 %s288, 4
          %s303 = int_to_ptr.vmem [resolvable:$true] %s302
          %305 = dma.vmem_to_hbm [thread:$0]  %s303, 64, %s300, %s285
        $region36: #{tpu_custom_call.1} parent=23 // pred_fallthru
          _
        // Predicated region
        $region37: #{tpu_custom_call.1} parent=23 // pred_check
          %p306 = pneg %p104
        $region38: #{tpu_custom_call.1} parent=23 // pred_check_branch
          %308 = sbr.rel (%p306) target = $region40
        $region39: #{tpu_custom_call.1} parent=23 // pred_region
          _
        $region40: #{tpu_custom_call.1} parent=23 // pred_fallthru
          _
      $region24: #{tpu_custom_call.1} parent=5 // pred_fallthru
        _
      %p309 = scmp.le.s32.totalorder 2, %s15
      // Predicated region
      $region41: #{tpu_custom_call.1} parent=5 // pred_check
        %p310 = pneg %p309
      $region42: #{tpu_custom_call.1} parent=5 // pred_check_branch
        %312 = sbr.rel (%p310) target = $region44
      $region43: #{tpu_custom_call.1} parent=5 // pred_region
        %s313 = ssub.s32 %s15, 2
        // Predicated region
        $region45: #{tpu_custom_call.1} parent=43 // pred_check
          %p314 = pneg %p84
        $region46: #{tpu_custom_call.1} parent=43 // pred_check_branch
          %316 = sbr.rel (%p314) target = $region48
        $region47: #{tpu_custom_call.1} parent=43 // pred_region
          %s317 = sand.u32 %s69, 1
          %s318 = scalar_lea.sflag [#allocation4], %s317
          %s319 = sand.u32 %s69, 1
          %s320 = smul.addr %s319, 4
          %s321 = scalar_lea.vmem [#allocation5], %s320
          %322 = dma.done %s318, 64
        $region48: #{tpu_custom_call.1} parent=43 // pred_fallthru
          _
        // Predicated region
        $region49: #{tpu_custom_call.1} parent=43 // pred_check
          %p323 = pneg %p110
        $region50: #{tpu_custom_call.1} parent=43 // pred_check_branch
          %325 = sbr.rel (%p323) target = $region52
        $region51: #{tpu_custom_call.1} parent=43 // pred_region
          %p326 = scmp.lt.s32.totalorder %s26, 1
          %s327 = scalar_select %p326, %s26, 1
          %s328 = smul.addr %s327, 4
          %s329 = scalar_lea.vmem %s2, %s328
        $region52: #{tpu_custom_call.1} parent=43 // pred_fallthru
          _
      $region44: #{tpu_custom_call.1} parent=5 // pred_fallthru
        _
    $region6: #{tpu_custom_call.1} parent=1 // loop_footer
      %s19 = sadd.s32 1, %s15
    $region7: #{tpu_custom_call.1} parent=1 // loop_footer_branch
      %14 = sbr.rel target = $region3
    $region8: #{tpu_custom_call.1} parent=1 // loop_exit
      _
    %330 = vsyncpa [#allocation3], 1
    %s331 = scalar_lea.sflag [#allocation3], 1
    %332 = vsyncpa %s331, 1
    %333 = vsyncpa [#allocation4], 1
    %s334 = scalar_lea.sflag [#allocation4], 1
    %335 = vsyncpa %s334, 1

</llo_original>
